<compile_context>
chip_gen: v6e
topology: v6e:2x2x1
jax: 0.10.0
libtpu: 0.0.40
codegen_flags: <defaults>
</compile_context>

<pallas_src>
import functools

import jax
import jax.numpy as jnp
from jax.experimental import pallas as pl
from jax.experimental.pallas import tpu as pltpu


_MIN_TILE = 16  # bf16 sublane packing for the output block


def _round_up(x, m):
    return (x + m - 1) // m * m


def _cdiv(a, b):
    return -(-a // b)


def subnet_kernel(x_ref, w1_ref, b1_ref, w2_ref, b2_ref, w3_ref, b3_ref, o_ref):
    """One batch tile of the fused MLP (eval-mode SubNet).

    x_ref  : (TB, num_inputs)  f32  (cast to bf16 in-kernel; avoids a wrapper HBM pass)
    w1_ref : (num_inputs, H)   bf16 (BatchNorm folded in)
    b1_ref : (1, H)            f32  (= b1*bn_scale + bn_shift)
    w2_ref : (H, H)            bf16
    b2_ref : (1, H)            f32
    w3_ref : (H, OUT_PAD)      bf16 (zero-padded to a 128-lane multiple)
    b3_ref : (1, OUT_PAD)      f32
    o_ref  : (TB, OUT_PAD)     bf16 (lane-dense writeback, half the bytes of f32)
    """
    x = x_ref[...].astype(jnp.bfloat16)

    # Linear1 (+ folded BatchNorm) + ReLU1.  bf16 MXU inputs, f32 accumulate, f32 epilogue.
    h = jnp.dot(x, w1_ref[...], preferred_element_type=jnp.float32) + b1_ref[...]
    h = jnp.maximum(h, 0.0)
    # Dropout(p=0.3) is the identity in eval mode.
    # TODO(synk): train-mode dropout / batch-stat BatchNorm not implemented (eval semantics only).

    # Linear2 + ReLU2
    h = jnp.dot(h.astype(w2_ref.dtype), w2_ref[...],
                preferred_element_type=jnp.float32) + b2_ref[...]
    h = jnp.maximum(h, 0.0)

    # Linear3 (output columns padded to full 128-lane tiles -> unmasked vst)
    out = jnp.dot(h.astype(w3_ref.dtype), w3_ref[...],
                  preferred_element_type=jnp.float32) + b3_ref[...]
    o_ref[...] = out.astype(o_ref.dtype)


def _choose_batch_tile(B, block_b):
    """Pick (tile_rows, num_tiles).

    - tiles are multiples of 16 rows (bf16 output sublane packing), capped at block_b
    - >= 2 grid steps whenever the batch allows it (so v7x's two TensorCores both work)
    - the batch is split as evenly as possible to minimize tail padding
    - tiny batches use a single tile equal to the full batch (block == full dims is
      always a legal block shape, and avoids any padding).
    """
    block_b = max(_MIN_TILE, _round_up(block_b, _MIN_TILE))
    if B < 2 * _MIN_TILE:
        return B, 1
    n_tiles = max(2, _cdiv(B, block_b))
    tb = min(block_b, _round_up(_cdiv(B, n_tiles), _MIN_TILE))
    return tb, _cdiv(B, tb)


@functools.partial(jax.jit, static_argnames=("num_outputs", "block_b"))
def subnet_forward(x, kernel_params, *, num_outputs, block_b=1024):
    """Eval-mode forward.  x is NCHW; FlattenLayer == row-major reshape to (B, C*H*W)."""
    B = x.shape[0]
    x2d = x.reshape(B, -1)                    # Flatten; stays f32, cast happens in-kernel
    num_inputs = x2d.shape[1]

    (w1f, b1f, w2b, b2f, w3p, b3p) = kernel_params
    hidden = w1f.shape[1]
    out_pad = w3p.shape[1]

    tb, nb = _choose_batch_tile(B, block_b)
    b_pad = nb * tb
    if b_pad != B:                            # pad only when the tile doesn't divide B
        x2d = jnp.pad(x2d, ((0, b_pad - B), (0, 0)))

    # Advisory cost estimate (helps XLA schedule around the custom call).
    flops = 2 * b_pad * (num_inputs * hidden + hidden * hidden + hidden * out_pad)
    bytes_accessed = (b_pad * num_inputs * 4            # x (f32 in)
                      + b_pad * out_pad * 2             # out (bf16)
                      + (w1f.size + w2b.size + w3p.size) * 2
                      + (b1f.size + b2f.size + b3p.size) * 4)
    cost = pl.CostEstimate(flops=flops, transcendentals=0,
                           bytes_accessed=bytes_accessed)

    # VMEM budget: double-buffered x/out tiles + resident (double-buffered) weights
    # + a few f32 intermediates.  Keep the scoped limit comfortably above that,
    # capped at v7x's 64 MiB physical VMEM.
    vmem_need = (2 * (tb * num_inputs * 4 + tb * out_pad * 2)
                 + 2 * ((w1f.size + w2b.size + w3p.size) * 2
                        + (b1f.size + b2f.size + b3p.size) * 4)
                 + 4 * tb * hidden * 4)
    vmem_limit = int(min(64 * 1024 * 1024, max(32 * 1024 * 1024, 2 * vmem_need)))

    out = pl.pallas_call(
        subnet_kernel,
        out_shape=jax.ShapeDtypeStruct((b_pad, out_pad), jnp.bfloat16),
        grid_spec=pltpu.PrefetchScalarGridSpec(
            num_scalar_prefetch=0,
            grid=(nb,),
            in_specs=[
                # x: tiled over batch
                pl.BlockSpec((tb, num_inputs), lambda i: (i, 0)),
                # weights/biases: constant block index -> VMEM-resident, no re-DMA per tile
                pl.BlockSpec(w1f.shape, lambda i: (0, 0)),
                pl.BlockSpec(b1f.shape, lambda i: (0, 0)),
                pl.BlockSpec(w2b.shape, lambda i: (0, 0)),
                pl.BlockSpec(b2f.shape, lambda i: (0, 0)),
                pl.BlockSpec(w3p.shape, lambda i: (0, 0)),
                pl.BlockSpec(b3p.shape, lambda i: (0, 0)),
            ],
            out_specs=pl.BlockSpec((tb, out_pad), lambda i: (i, 0)),
        ),
        compiler_params=pltpu.CompilerParams(
            # batch tiles are independent -> megacore sharding on v7x, pipelining elsewhere
            dimension_semantics=("parallel",),
            vmem_limit_bytes=vmem_limit,
        ),
        cost_estimate=cost,
    )(x2d, w1f, b1f, w2b, b2f, w3p, b3p)

    return out[:B, :num_outputs].astype(jnp.float32)


def make_raw_params(key, num_inputs, num_hiddens, num_outputs):
    """Synthetic parameters with the same shapes/semantics as the PyTorch module.

    Linear weights are stored pre-transposed as (in, out) so the kernel computes x @ W + b.
    """
    k1, k2, k3, k4, k5, k6 = jax.random.split(key, 6)
    w1t = jax.random.normal(k1, (num_inputs, num_hiddens), jnp.float32) * 0.05
    b1 = jax.random.normal(k2, (num_hiddens,), jnp.float32) * 0.05
    w2t = jax.random.normal(k3, (num_hiddens, num_hiddens), jnp.float32) * 0.05
    b2 = jax.random.normal(k4, (num_hiddens,), jnp.float32) * 0.05
    w3t = jax.random.normal(k5, (num_hiddens, num_outputs), jnp.float32) * 0.05
    b3 = jax.random.normal(k6, (num_outputs,), jnp.float32) * 0.05

    # BatchNorm1d defaults: gamma=1, beta=0, running_mean=0, running_var=1, eps=1e-5.
    gamma = jnp.ones((num_hiddens,), jnp.float32)
    beta = jnp.zeros((num_hiddens,), jnp.float32)
    running_mean = jnp.zeros((num_hiddens,), jnp.float32)
    running_var = jnp.ones((num_hiddens,), jnp.float32)
    eps = 1e-5
    return (w1t, b1, w2t, b2, w3t, b3, gamma, beta, running_mean, running_var, eps)


def prepare_kernel_params(raw, num_outputs):
    """Fold eval-mode BN into Linear1, pad the output projection to 128 lanes,
    cast weights to bf16 (biases stay f32 for the f32 epilogue)."""
    (w1t, b1, w2t, b2, w3t, b3, gamma, beta, running_mean, running_var, eps) = raw

    inv_std = gamma / jnp.sqrt(running_var + eps)            # gamma / sqrt(var+eps)
    bn_scale = inv_std
    bn_shift = beta - running_mean * inv_std

    # y = ((x @ w1 + b1)) * bn_scale + bn_shift = x @ (w1 * bn_scale) + (b1*bn_scale + bn_shift)
    w1f = (w1t * bn_scale[None, :]).astype(jnp.bfloat16)
    b1f = (b1 * bn_scale + bn_shift).reshape(1, -1).astype(jnp.float32)

    w2b = w2t.astype(jnp.bfloat16)
    b2f = b2.reshape(1, -1).astype(jnp.float32)

    out_pad = _round_up(num_outputs, 128)
    w3p = jnp.pad(w3t, ((0, 0), (0, out_pad - num_outputs))).astype(jnp.bfloat16)
    b3p = jnp.pad(b3, (0, out_pad - num_outputs)).reshape(1, -1).astype(jnp.float32)

    return (w1f, b1f, w2b, b2f, w3p, b3p)


def reference_forward_f32(x, raw):
    """Pure-f32 plain-JAX reference of the eval-mode module."""
    (w1t, b1, w2t, b2, w3t, b3, gamma, beta, running_mean, running_var, eps) = raw
    h = x.reshape(x.shape[0], -1) @ w1t + b1
    h = (h - running_mean) / jnp.sqrt(running_var + eps) * gamma + beta   # BN eval
    h = jnp.maximum(h, 0.0)
    # Dropout is the identity in eval mode.
    h = jnp.maximum(h @ w2t + b2, 0.0)
    return h @ w3t + b3


def reference_forward_bf16(x, kernel_params, num_outputs):
    """Plain-JAX reference mirroring the kernel's bf16-in / f32-accumulate / bf16-out numerics."""
    (w1f, b1f, w2b, b2f, w3p, b3p) = kernel_params
    xb = x.reshape(x.shape[0], -1).astype(jnp.bfloat16)
    h = jnp.dot(xb, w1f, preferred_element_type=jnp.float32) + b1f
    h = jnp.maximum(h, 0.0)
    h = jnp.dot(h.astype(jnp.bfloat16), w2b, preferred_element_type=jnp.float32) + b2f
    h = jnp.maximum(h, 0.0)
    out = jnp.dot(h.astype(jnp.bfloat16), w3p, preferred_element_type=jnp.float32) + b3p
    return out.astype(jnp.bfloat16)[:, :num_outputs].astype(jnp.float32)


def _check(x, raw, kernel_params, num_outputs):
    out = subnet_forward(x, kernel_params, num_outputs=num_outputs)
    out = jax.block_until_ready(out)
    assert out.shape == (x.shape[0], num_outputs)

    # Tight check vs a reference with matching bf16 numerics.
    ref_bf16 = reference_forward_bf16(x, kernel_params, num_outputs)
    assert jnp.allclose(out, ref_bf16, atol=8e-3, rtol=8e-3), \
        "Pallas kernel mismatch vs bf16-matched reference"

    # Loose sanity check vs the full-f32 eval-mode module.
    ref_f32 = reference_forward_f32(x, raw)
    assert jnp.allclose(out, ref_f32, atol=6e-2, rtol=6e-2), \
        "Pallas kernel mismatch vs f32 reference"
    return out


if __name__ == "__main__":
    # Small shapes: x is NCHW (B=8, C=4, H=8, W=8) -> num_inputs = 4*8*8 = 256
    B, C, H, W = 8, 4, 8, 8
    num_inputs = C * H * W        # 256
    num_hiddens = 128
    num_outputs = 64

    key = jax.random.PRNGKey(0)
    kx, kx2, kp = jax.random.split(key, 3)
    x = jax.random.normal(kx, (B, C, H, W), jnp.float32)

    raw = make_raw_params(kp, num_inputs, num_hiddens, num_outputs)
    kernel_params = prepare_kernel_params(raw, num_outputs)

    # Single-tile path (tiny batch, block == full dims, no padding).
    _check(x, raw, kernel_params, num_outputs)

    # Multi-tile path (grid of 2, ragged batch -> tail padding), exercises megacore sharding.
    x_big = jax.random.normal(kx2, (48, C, H, W), jnp.float32)
    _check(x_big, raw, kernel_params, num_outputs)

    print("KERNEL_OK")
</pallas_src>

<mosaic_0001>
module attributes {stable_mosaic.version = 11 : i64} {
  func.func @subnet_kernel(%arg0: i32, %arg1: memref<8x256xf32, #tpu.memory_space<vmem>>, %arg2: memref<256x128xbf16, #tpu.memory_space<vmem>>, %arg3: memref<1x128xf32, #tpu.memory_space<vmem>>, %arg4: memref<128x128xbf16, #tpu.memory_space<vmem>>, %arg5: memref<1x128xf32, #tpu.memory_space<vmem>>, %arg6: memref<128x128xbf16, #tpu.memory_space<vmem>>, %arg7: memref<1x128xf32, #tpu.memory_space<vmem>>, %arg8: memref<8x128xbf16, #tpu.memory_space<vmem>>) attributes {dimension_semantics = [#tpu.dimension_semantics<parallel>], iteration_bounds = array<i64: 1>, scalar_prefetch = 0 : i64, scratch_operands = 0 : i64, tpu.core_type = #tpu.core_type<tc>, window_params = [{transform_indices = @transform_0, window_bounds = array<i64: 8, 256>}, {pipeline_mode = #tpu.pipeline_mode<synchronous>, transform_indices = @transform_1, window_bounds = array<i64: 256, 128>}, {pipeline_mode = #tpu.pipeline_mode<synchronous>, transform_indices = @transform_2, window_bounds = array<i64: 1, 128>}, {pipeline_mode = #tpu.pipeline_mode<synchronous>, transform_indices = @transform_3, window_bounds = array<i64: 128, 128>}, {pipeline_mode = #tpu.pipeline_mode<synchronous>, transform_indices = @transform_4, window_bounds = array<i64: 1, 128>}, {pipeline_mode = #tpu.pipeline_mode<synchronous>, transform_indices = @transform_5, window_bounds = array<i64: 128, 128>}, {pipeline_mode = #tpu.pipeline_mode<synchronous>, transform_indices = @transform_6, window_bounds = array<i64: 1, 128>}, {transform_indices = @transform_7, window_bounds = array<i64: 8, 128>}]} {
    %c0 = arith.constant 0 : index
    %c0_0 = arith.constant 0 : index
    %0 = vector.load %arg1[%c0, %c0_0] : memref<8x256xf32, #tpu.memory_space<vmem>>, vector<8x256xf32>
    %1 = arith.truncf %0 : vector<8x256xf32> to vector<8x256xbf16>
    %c0_1 = arith.constant 0 : index
    %c0_2 = arith.constant 0 : index
    %2 = vector.load %arg2[%c0_1, %c0_2] : memref<256x128xbf16, #tpu.memory_space<vmem>>, vector<256x128xbf16>
    %cst = arith.constant dense<0.000000e+00> : vector<8x128xf32>
    %3 = tpu.matmul %1, %2, %cst {dimension_numbers = #tpu.dot_dimension_numbers<[1], [0], [0], [1], [0, 0, 1, 1], [], []>} : vector<8x256xbf16>, vector<256x128xbf16>, vector<8x128xf32> -> vector<8x128xf32>
    %c0_3 = arith.constant 0 : index
    %c0_4 = arith.constant 0 : index
    %4 = vector.load %arg3[%c0_3, %c0_4] : memref<1x128xf32, #tpu.memory_space<vmem>>, vector<1x128xf32>
    %5 = vector.broadcast %4 : vector<1x128xf32> to vector<8x128xf32>
    %6 = arith.addf %3, %5 : vector<8x128xf32>
    %cst_5 = arith.constant 0.000000e+00 : f32
    %7 = vector.broadcast %cst_5 : f32 to vector<8x128xf32>
    %8 = arith.maximumf %6, %7 : vector<8x128xf32>
    %9 = arith.truncf %8 : vector<8x128xf32> to vector<8x128xbf16>
    %c0_6 = arith.constant 0 : index
    %c0_7 = arith.constant 0 : index
    %10 = vector.load %arg4[%c0_6, %c0_7] : memref<128x128xbf16, #tpu.memory_space<vmem>>, vector<128x128xbf16>
    %cst_8 = arith.constant dense<0.000000e+00> : vector<8x128xf32>
    %11 = tpu.matmul %9, %10, %cst_8 {dimension_numbers = #tpu.dot_dimension_numbers<[1], [0], [0], [1], [0, 0, 1, 1], [], []>} : vector<8x128xbf16>, vector<128x128xbf16>, vector<8x128xf32> -> vector<8x128xf32>
    %c0_9 = arith.constant 0 : index
    %c0_10 = arith.constant 0 : index
    %12 = vector.load %arg5[%c0_9, %c0_10] : memref<1x128xf32, #tpu.memory_space<vmem>>, vector<1x128xf32>
    %13 = vector.broadcast %12 : vector<1x128xf32> to vector<8x128xf32>
    %14 = arith.addf %11, %13 : vector<8x128xf32>
    %cst_11 = arith.constant 0.000000e+00 : f32
    %15 = vector.broadcast %cst_11 : f32 to vector<8x128xf32>
    %16 = arith.maximumf %14, %15 : vector<8x128xf32>
    %17 = arith.truncf %16 : vector<8x128xf32> to vector<8x128xbf16>
    %c0_12 = arith.constant 0 : index
    %c0_13 = arith.constant 0 : index
    %18 = vector.load %arg6[%c0_12, %c0_13] : memref<128x128xbf16, #tpu.memory_space<vmem>>, vector<128x128xbf16>
    %cst_14 = arith.constant dense<0.000000e+00> : vector<8x128xf32>
    %19 = tpu.matmul %17, %18, %cst_14 {dimension_numbers = #tpu.dot_dimension_numbers<[1], [0], [0], [1], [0, 0, 1, 1], [], []>} : vector<8x128xbf16>, vector<128x128xbf16>, vector<8x128xf32> -> vector<8x128xf32>
    %c0_15 = arith.constant 0 : index
    %c0_16 = arith.constant 0 : index
    %20 = vector.load %arg7[%c0_15, %c0_16] : memref<1x128xf32, #tpu.memory_space<vmem>>, vector<1x128xf32>
    %21 = vector.broadcast %20 : vector<1x128xf32> to vector<8x128xf32>
    %22 = arith.addf %19, %21 : vector<8x128xf32>
    %23 = arith.truncf %22 : vector<8x128xf32> to vector<8x128xbf16>
    %c0_17 = arith.constant 0 : index
    %c0_18 = arith.constant 0 : index
    %24 = vector.load %arg8[%c0_17, %c0_18] : memref<8x128xbf16, #tpu.memory_space<vmem>>, vector<8x128xbf16>
    tpu.vector_store %arg8[%c0_17, %c0_18], %23 {strides = array<i32>} : memref<8x128xbf16, #tpu.memory_space<vmem>>, vector<8x128xbf16>,
    return
  }
  func.func @transform_0(%arg0: i32) -> (i32, i32) {
    %c0_i32 = arith.constant 0 : i32
    %c0_i32_0 = arith.constant 0 : i32
    return %arg0, %c0_i32 : i32, i32
  }
  func.func @transform_1(%arg0: i32) -> (i32, i32) {
    %c0_i32 = arith.constant 0 : i32
    %c0_i32_0 = arith.constant 0 : i32
    %c0_i32_1 = arith.constant 0 : i32
    return %c0_i32, %c0_i32_0 : i32, i32
  }
  func.func @transform_2(%arg0: i32) -> (i32, i32) {
    %c0_i32 = arith.constant 0 : i32
    %c0_i32_0 = arith.constant 0 : i32
    %c0_i32_1 = arith.constant 0 : i32
    return %c0_i32, %c0_i32_0 : i32, i32
  }
  func.func @transform_3(%arg0: i32) -> (i32, i32) {
    %c0_i32 = arith.constant 0 : i32
    %c0_i32_0 = arith.constant 0 : i32
    %c0_i32_1 = arith.constant 0 : i32
    return %c0_i32, %c0_i32_0 : i32, i32
  }
  func.func @transform_4(%arg0: i32) -> (i32, i32) {
    %c0_i32 = arith.constant 0 : i32
    %c0_i32_0 = arith.constant 0 : i32
    %c0_i32_1 = arith.constant 0 : i32
    return %c0_i32, %c0_i32_0 : i32, i32
  }
  func.func @transform_5(%arg0: i32) -> (i32, i32) {
    %c0_i32 = arith.constant 0 : i32
    %c0_i32_0 = arith.constant 0 : i32
    %c0_i32_1 = arith.constant 0 : i32
    return %c0_i32, %c0_i32_0 : i32, i32
  }
  func.func @transform_6(%arg0: i32) -> (i32, i32) {
    %c0_i32 = arith.constant 0 : i32
    %c0_i32_0 = arith.constant 0 : i32
    %c0_i32_1 = arith.constant 0 : i32
    return %c0_i32, %c0_i32_0 : i32, i32
  }
  func.func @transform_7(%arg0: i32) -> (i32, i32) {
    %c0_i32 = arith.constant 0 : i32
    %c0_i32_0 = arith.constant 0 : i32
    return %arg0, %c0_i32 : i32, i32
  }
}

</mosaic_0001>

<llo_original>
// kernel: subnet_forward.1
$region0: #{subnet_forward.1}
  #allocation0 [shape = 'u32[]', space=smem, size = 0x4, offset = 0x4, fixed_abs, tag = 'smem constant byte address 0x4 - core index']
  #allocation1 [shape = 'u32[144,128]{1,0:T(1,128)}', space=vmem, size = 0x12000, scoped, tag = 'internal scratch']
  %s0 = inlined_call_operand.vmem [shape: f32[8,256], index: 0, kind: input, shape index: {}]
  %s1 = inlined_call_operand.vmem [shape: bf16[256,128], index: 1, kind: input, shape index: {}]
  %s2 = inlined_call_operand.vmem [shape: f32[1,128], index: 2, kind: input, shape index: {}]
  %s3 = inlined_call_operand.vmem [shape: bf16[128,128], index: 3, kind: input, shape index: {}]
  %s4 = inlined_call_operand.vmem [shape: f32[1,128], index: 4, kind: input, shape index: {}]
  %s5 = inlined_call_operand.vmem [shape: bf16[128,128], index: 5, kind: input, shape index: {}]
  %s6 = inlined_call_operand.vmem [shape: f32[1,128], index: 6, kind: input, shape index: {}]
  %s7 = inlined_call_operand.vmem [shape: bf16[8,128], index: 7, kind: output, shape index: {}]
  %s8 = sld [smem:[#allocation0]]
  $region38: #{subnet_forward.1} parent=0
    _
  %s10 = ssub.s32 1, %s8
  %s11 = scalar_select 0, %s10, %s8
  // Predicated region
  $region2: #{subnet_forward.1} parent=0 // pred_check
    _
  $region3: #{subnet_forward.1} parent=0 // pred_check_branch
    %13 = sbr.rel (0) target = $region5
  $region4: #{subnet_forward.1} parent=0 // pred_region
    _
  $region5: #{subnet_forward.1} parent=0 // pred_fallthru
    _
  // Predicated region
  $region6: #{subnet_forward.1} parent=0 // pred_check
    _
  $region7: #{subnet_forward.1} parent=0 // pred_check_branch
    %15 = sbr.rel (0) target = $region9
  $region8: #{subnet_forward.1} parent=0 // pred_region
    _
  $region9: #{subnet_forward.1} parent=0 // pred_fallthru
    _
  // Predicated region
  $region10: #{subnet_forward.1} parent=0 // pred_check
    _
  $region11: #{subnet_forward.1} parent=0 // pred_check_branch
    %17 = sbr.rel (0) target = $region13
  $region12: #{subnet_forward.1} parent=0 // pred_region
    _
  $region13: #{subnet_forward.1} parent=0 // pred_fallthru
    _
  // Predicated region
  $region14: #{subnet_forward.1} parent=0 // pred_check
    _
  $region15: #{subnet_forward.1} parent=0 // pred_check_branch
    %19 = sbr.rel (0) target = $region17
  $region16: #{subnet_forward.1} parent=0 // pred_region
    _
  $region17: #{subnet_forward.1} parent=0 // pred_fallthru
    _
  // Predicated region
  $region18: #{subnet_forward.1} parent=0 // pred_check
    _
  $region19: #{subnet_forward.1} parent=0 // pred_check_branch
    %21 = sbr.rel (0) target = $region21
  $region20: #{subnet_forward.1} parent=0 // pred_region
    _
  $region21: #{subnet_forward.1} parent=0 // pred_fallthru
    _
  // Predicated region
  $region22: #{subnet_forward.1} parent=0 // pred_check
    _
  $region23: #{subnet_forward.1} parent=0 // pred_check_branch
    %23 = sbr.rel (0) target = $region25
  $region24: #{subnet_forward.1} parent=0 // pred_region
    _
  $region25: #{subnet_forward.1} parent=0 // pred_fallthru
    _
  // Predicated region
  $region26: #{subnet_forward.1} parent=0 // pred_check
    _
  $region27: #{subnet_forward.1} parent=0 // pred_check_branch
    %25 = sbr.rel (0) target = $region29
  $region28: #{subnet_forward.1} parent=0 // pred_region
    _
  $region29: #{subnet_forward.1} parent=0 // pred_fallthru
    _
  %v27 = vld [vmem:[%s0] sm:$0xff]
  %v28 = vld [vmem:[%s0 + $0x8] sm:$0xff]
  %v29 = vpack.c.bf16 %v27, %v27
  %v30 = vpack.c.bf16 %v28, %v28
  %v31 = vld [vmem:[%s1] sm:$0xf]
  %v32 = vld [vmem:[%s1 + $0x4] sm:$0xf]
  %v33 = vld [vmem:[%s1 + $0x8] sm:$0xf]
  %v34 = vld [vmem:[%s1 + $0xc] sm:$0xf]
  %v35 = vld [vmem:[%s1 + $0x10] sm:$0xf]
  %v36 = vld [vmem:[%s1 + $0x14] sm:$0xf]
  %v37 = vld [vmem:[%s1 + $0x18] sm:$0xf]
  %v38 = vld [vmem:[%s1 + $0x1c] sm:$0xf]
  %v39 = vld [vmem:[%s1 + $0x20] sm:$0xf]
  %v40 = vld [vmem:[%s1 + $0x24] sm:$0xf]
  %v41 = vld [vmem:[%s1 + $0x28] sm:$0xf]
  %v42 = vld [vmem:[%s1 + $0x2c] sm:$0xf]
  %v43 = vld [vmem:[%s1 + $0x30] sm:$0xf]
  %v44 = vld [vmem:[%s1 + $0x34] sm:$0xf]
  %v45 = vld [vmem:[%s1 + $0x38] sm:$0xf]
  %v46 = vld [vmem:[%s1 + $0x3c] sm:$0xf]
  %v47 = vld [vmem:[%s1 + $0x40] sm:$0xf]
  %v48 = vld [vmem:[%s1 + $0x44] sm:$0xf]
  %v49 = vld [vmem:[%s1 + $0x48] sm:$0xf]
  %v50 = vld [vmem:[%s1 + $0x4c] sm:$0xf]
  %v51 = vld [vmem:[%s1 + $0x50] sm:$0xf]
  %v52 = vld [vmem:[%s1 + $0x54] sm:$0xf]
  %v53 = vld [vmem:[%s1 + $0x58] sm:$0xf]
  %v54 = vld [vmem:[%s1 + $0x5c] sm:$0xf]
  %v55 = vld [vmem:[%s1 + $0x60] sm:$0xf]
  %v56 = vld [vmem:[%s1 + $0x64] sm:$0xf]
  %v57 = vld [vmem:[%s1 + $0x68] sm:$0xf]
  %v58 = vld [vmem:[%s1 + $0x6c] sm:$0xf]
  %v59 = vld [vmem:[%s1 + $0x70] sm:$0xf]
  %v60 = vld [vmem:[%s1 + $0x74] sm:$0xf]
  %v61 = vld [vmem:[%s1 + $0x78] sm:$0xf]
  %v62 = vld [vmem:[%s1 + $0x7c] sm:$0xf]
  %v63 = vld [vmem:[%s2] sm:$0x1]
  %v65 = vlaneseq
  %v66 = vshrl.u32 %v65, 7
  %v67 = vsub.s32 0, %v66
  %v68 = vrot.slane %v63, %v67
  %v102 = vunpack.c.l.b16 %v31
  %v103 = vunpack.c.l.b16 %v32
  %v104 = vunpack.c.l.b16 %v33
  %v105 = vunpack.c.l.b16 %v34
  %v106 = vunpack.c.l.b16 %v35
  %v107 = vunpack.c.l.b16 %v36
  %v108 = vunpack.c.l.b16 %v37
  %v109 = vunpack.c.l.b16 %v38
  %v110 = vunpack.c.l.b16 %v39
  %v111 = vunpack.c.l.b16 %v40
  %v112 = vunpack.c.l.b16 %v41
  %v113 = vunpack.c.l.b16 %v42
  %v114 = vunpack.c.l.b16 %v43
  %v115 = vunpack.c.l.b16 %v44
  %v116 = vunpack.c.l.b16 %v45
  %v117 = vunpack.c.l.b16 %v46
  %v118 = vunpack.c.l.b16 %v47
  %v119 = vunpack.c.l.b16 %v48
  %v120 = vunpack.c.l.b16 %v49
  %v121 = vunpack.c.l.b16 %v50
  %v122 = vunpack.c.l.b16 %v51
  %v123 = vunpack.c.l.b16 %v52
  %v124 = vunpack.c.l.b16 %v53
  %v125 = vunpack.c.l.b16 %v54
  %v126 = vunpack.c.l.b16 %v55
  %v127 = vunpack.c.l.b16 %v56
  %v128 = vunpack.c.l.b16 %v57
  %v129 = vunpack.c.l.b16 %v58
  %v130 = vunpack.c.l.b16 %v59
  %v131 = vunpack.c.l.b16 %v60
  %v132 = vunpack.c.l.b16 %v61
  %v133 = vunpack.c.l.b16 %v62
  %v134 = vpack.c.b16 %v103, %v102
  %v135 = vpack.c.b16 %v105, %v104
  %v136 = vpack.c.b16 %v107, %v106
  %v137 = vpack.c.b16 %v109, %v108
  %v138 = vpack.c.b16 %v111, %v110
  %v139 = vpack.c.b16 %v113, %v112
  %v140 = vpack.c.b16 %v115, %v114
  %v141 = vpack.c.b16 %v117, %v116
  %v142 = vpack.c.b16 %v119, %v118
  %v143 = vpack.c.b16 %v121, %v120
  %v144 = vpack.c.b16 %v123, %v122
  %v145 = vpack.c.b16 %v125, %v124
  %v146 = vpack.c.b16 %v127, %v126
  %v147 = vpack.c.b16 %v129, %v128
  %v148 = vpack.c.b16 %v131, %v130
  %v149 = vpack.c.b16 %v133, %v132
  %166 = vmatprep.subr.bf16.mxu0 0
  %167 = vmatpush1.bf16.msra.mxu0 %v141
  %168 = vmatprep.subr.bf16.mxu0 0
  %169 = vmatpush1.bf16.msra.mxu0 %v140
  %170 = vmatprep.subr.bf16.mxu0 0
  %171 = vmatpush1.bf16.msra.mxu0 %v139
  %172 = vmatprep.subr.bf16.mxu0 0
  %173 = vmatpush1.bf16.msra.mxu0 %v138
  %174 = vmatprep.subr.bf16.mxu0 0
  %175 = vmatpush1.bf16.msra.mxu0 %v137
  %176 = vmatprep.subr.bf16.mxu0 0
  %177 = vmatpush1.bf16.msra.mxu0 %v136
  %178 = vmatprep.subr.bf16.mxu0 0
  %179 = vmatpush1.bf16.msra.mxu0 %v135
  %180 = vmatprep.subr.bf16.mxu0 0
  %181 = vmatpush1.bf16.msra.mxu0 %v134
  %182 = vmatprep.subr.bf16.mxu0 0
  %183 = vmatpush2.bf16.msra.mxu0 %v149
  %184 = vmatprep.subr.bf16.mxu0 0
  %185 = vmatpush2.bf16.msra.mxu0 %v148
  %186 = vmatprep.subr.bf16.mxu0 0
  %187 = vmatpush2.bf16.msra.mxu0 %v147
  %188 = vmatprep.subr.bf16.mxu0 0
  %189 = vmatpush2.bf16.msra.mxu0 %v146
  %190 = vmatprep.subr.bf16.mxu0 0
  %191 = vmatpush2.bf16.msra.mxu0 %v145
  %192 = vmatprep.subr.bf16.mxu0 0
  %193 = vmatpush2.bf16.msra.mxu0 %v144
  %194 = vmatprep.subr.bf16.mxu0 0
  %195 = vmatpush2.bf16.msra.mxu0 %v143
  %196 = vmatprep.subr.bf16.mxu0 0
  %197 = vmatpush2.bf16.msra.mxu0 %v142
  %198 = vmatprep.mubr.bf16.mxu0 %v30
  %199 = vmatmul.mubr.bf16.gmra.mxu0 %v29
  %v200 = vpop.f32.mrf.mxu0
  %v201 = vadd.f32 %v68, %v200
  %v202 = vpop.f32.mrf.mxu0
  %v203 = vpop.f32.mrf.mxu0
  %v204 = vpop.f32.mrf.mxu0
  %205 = vdwg.mxu0
  %v206 = vmax.f32 %v201, 0.0
  %v207 = vpack.c.bf16 %v206, %v206
  %v208 = vld [vmem:[%s3] sm:$0xf]
  %v209 = vld [vmem:[%s3 + $0x4] sm:$0xf]
  %v210 = vld [vmem:[%s3 + $0x8] sm:$0xf]
  %v211 = vld [vmem:[%s3 + $0xc] sm:$0xf]
  %v212 = vld [vmem:[%s3 + $0x10] sm:$0xf]
  %v213 = vld [vmem:[%s3 + $0x14] sm:$0xf]
  %v214 = vld [vmem:[%s3 + $0x18] sm:$0xf]
  %v215 = vld [vmem:[%s3 + $0x1c] sm:$0xf]
  %v216 = vld [vmem:[%s3 + $0x20] sm:$0xf]
  %v217 = vld [vmem:[%s3 + $0x24] sm:$0xf]
  %v218 = vld [vmem:[%s3 + $0x28] sm:$0xf]
  %v219 = vld [vmem:[%s3 + $0x2c] sm:$0xf]
  %v220 = vld [vmem:[%s3 + $0x30] sm:$0xf]
  %v221 = vld [vmem:[%s3 + $0x34] sm:$0xf]
  %v222 = vld [vmem:[%s3 + $0x38] sm:$0xf]
  %v223 = vld [vmem:[%s3 + $0x3c] sm:$0xf]
  %v224 = vld [vmem:[%s4] sm:$0x1]
  %v226 = vlaneseq
  %v227 = vshrl.u32 %v226, 7
  %v228 = vsub.s32 0, %v227
  %v229 = vrot.slane %v224, %v228
  %v247 = vunpack.c.l.b16 %v208
  %v248 = vunpack.c.l.b16 %v209
  %v249 = vunpack.c.l.b16 %v210
  %v250 = vunpack.c.l.b16 %v211
  %v251 = vunpack.c.l.b16 %v212
  %v252 = vunpack.c.l.b16 %v213
  %v253 = vunpack.c.l.b16 %v214
  %v254 = vunpack.c.l.b16 %v215
  %v255 = vunpack.c.l.b16 %v216
  %v256 = vunpack.c.l.b16 %v217
  %v257 = vunpack.c.l.b16 %v218
  %v258 = vunpack.c.l.b16 %v219
  %v259 = vunpack.c.l.b16 %v220
  %v260 = vunpack.c.l.b16 %v221
  %v261 = vunpack.c.l.b16 %v222
  %v262 = vunpack.c.l.b16 %v223
  %v263 = vpack.c.b16 %v248, %v247
  %v264 = vpack.c.b16 %v250, %v249
  %v265 = vpack.c.b16 %v252, %v251
  %v266 = vpack.c.b16 %v254, %v253
  %v267 = vpack.c.b16 %v256, %v255
  %v268 = vpack.c.b16 %v258, %v257
  %v269 = vpack.c.b16 %v260, %v259
  %v270 = vpack.c.b16 %v262, %v261
  %279 = vmatprep.subr.bf16.mxu0 0
  %280 = vmatpush1.bf16.msra.mxu0 %v270
  %281 = vmatprep.subr.bf16.mxu0 0
  %282 = vmatpush1.bf16.msra.mxu0 %v269
  %283 = vmatprep.subr.bf16.mxu0 0
  %284 = vmatpush1.bf16.msra.mxu0 %v268
  %285 = vmatprep.subr.bf16.mxu0 0
  %286 = vmatpush1.bf16.msra.mxu0 %v267
  %287 = vmatprep.subr.bf16.mxu0 0
  %288 = vmatpush1.bf16.msra.mxu0 %v266
  %289 = vmatprep.subr.bf16.mxu0 0
  %290 = vmatpush1.bf16.msra.mxu0 %v265
  %291 = vmatprep.subr.bf16.mxu0 0
  %292 = vmatpush1.bf16.msra.mxu0 %v264
  %293 = vmatprep.subr.bf16.mxu0 0
  %294 = vmatpush1.bf16.msra.mxu0 %v263
  %295 = vmatprep.subr.bf16.mxu0 0
  %296 = vmatpush2.bf16.msra.mxu0 0
  %297 = vmatprep.subr.bf16.mxu0 0
  %298 = vmatpush2.bf16.msra.mxu0 0
  %299 = vmatprep.subr.bf16.mxu0 0
  %300 = vmatpush2.bf16.msra.mxu0 0
  %301 = vmatprep.subr.bf16.mxu0 0
  %302 = vmatpush2.bf16.msra.mxu0 0
  %303 = vmatprep.subr.bf16.mxu0 0
  %304 = vmatpush2.bf16.msra.mxu0 0
  %305 = vmatprep.subr.bf16.mxu0 0
  %306 = vmatpush2.bf16.msra.mxu0 0
  %307 = vmatprep.subr.bf16.mxu0 0
  %308 = vmatpush2.bf16.msra.mxu0 0
  %309 = vmatprep.subr.bf16.mxu0 0
  %310 = vmatpush2.bf16.msra.mxu0 0
  %311 = vmatprep.mubr.bf16.mxu0 0
  %312 = vmatmul.mubr.bf16.gmra.mxu0 %v207
  %v313 = vpop.f32.mrf.mxu0
  %v314 = vadd.f32 %v229, %v313
  %v315 = vpop.f32.mrf.mxu0
  %v316 = vpop.f32.mrf.mxu0
  %v317 = vpop.f32.mrf.mxu0
  %318 = vdwg.mxu0
  %v319 = vmax.f32 %v314, 0.0
  %v320 = vpack.c.bf16 %v319, %v319
  %v321 = vld [vmem:[%s5] sm:$0xf]
  %v322 = vld [vmem:[%s5 + $0x4] sm:$0xf]
  %v323 = vld [vmem:[%s5 + $0x8] sm:$0xf]
  %v324 = vld [vmem:[%s5 + $0xc] sm:$0xf]
  %v325 = vld [vmem:[%s5 + $0x10] sm:$0xf]
  %v326 = vld [vmem:[%s5 + $0x14] sm:$0xf]
  %v327 = vld [vmem:[%s5 + $0x18] sm:$0xf]
  %v328 = vld [vmem:[%s5 + $0x1c] sm:$0xf]
  %v329 = vld [vmem:[%s5 + $0x20] sm:$0xf]
  %v330 = vld [vmem:[%s5 + $0x24] sm:$0xf]
  %v331 = vld [vmem:[%s5 + $0x28] sm:$0xf]
  %v332 = vld [vmem:[%s5 + $0x2c] sm:$0xf]
  %v333 = vld [vmem:[%s5 + $0x30] sm:$0xf]
  %v334 = vld [vmem:[%s5 + $0x34] sm:$0xf]
  %v335 = vld [vmem:[%s5 + $0x38] sm:$0xf]
  %v336 = vld [vmem:[%s5 + $0x3c] sm:$0xf]
  %v337 = vld [vmem:[%s6] sm:$0x1]
  %v339 = vlaneseq
  %v340 = vshrl.u32 %v339, 7
  %v341 = vsub.s32 0, %v340
  %v342 = vrot.slane %v337, %v341
  %v360 = vunpack.c.l.b16 %v321
  %v361 = vunpack.c.l.b16 %v322
  %v362 = vunpack.c.l.b16 %v323
  %v363 = vunpack.c.l.b16 %v324
  %v364 = vunpack.c.l.b16 %v325
  %v365 = vunpack.c.l.b16 %v326
  %v366 = vunpack.c.l.b16 %v327
  %v367 = vunpack.c.l.b16 %v328
  %v368 = vunpack.c.l.b16 %v329
  %v369 = vunpack.c.l.b16 %v330
  %v370 = vunpack.c.l.b16 %v331
  %v371 = vunpack.c.l.b16 %v332
  %v372 = vunpack.c.l.b16 %v333
  %v373 = vunpack.c.l.b16 %v334
  %v374 = vunpack.c.l.b16 %v335
  %v375 = vunpack.c.l.b16 %v336
  %v376 = vpack.c.b16 %v361, %v360
  %v377 = vpack.c.b16 %v363, %v362
  %v378 = vpack.c.b16 %v365, %v364
  %v379 = vpack.c.b16 %v367, %v366
  %v380 = vpack.c.b16 %v369, %v368
  %v381 = vpack.c.b16 %v371, %v370
  %v382 = vpack.c.b16 %v373, %v372
  %v383 = vpack.c.b16 %v375, %v374
  %392 = vmatprep.subr.bf16.mxu0 0
  %393 = vmatpush1.bf16.msra.mxu0 %v383
  %394 = vmatprep.subr.bf16.mxu0 0
  %395 = vmatpush1.bf16.msra.mxu0 %v382
  %396 = vmatprep.subr.bf16.mxu0 0
  %397 = vmatpush1.bf16.msra.mxu0 %v381
  %398 = vmatprep.subr.bf16.mxu0 0
  %399 = vmatpush1.bf16.msra.mxu0 %v380
  %400 = vmatprep.subr.bf16.mxu0 0
  %401 = vmatpush1.bf16.msra.mxu0 %v379
  %402 = vmatprep.subr.bf16.mxu0 0
  %403 = vmatpush1.bf16.msra.mxu0 %v378
  %404 = vmatprep.subr.bf16.mxu0 0
  %405 = vmatpush1.bf16.msra.mxu0 %v377
  %406 = vmatprep.subr.bf16.mxu0 0
  %407 = vmatpush1.bf16.msra.mxu0 %v376
  %408 = vmatprep.subr.bf16.mxu0 0
  %409 = vmatpush2.bf16.msra.mxu0 0
  %410 = vmatprep.subr.bf16.mxu0 0
  %411 = vmatpush2.bf16.msra.mxu0 0
  %412 = vmatprep.subr.bf16.mxu0 0
  %413 = vmatpush2.bf16.msra.mxu0 0
  %414 = vmatprep.subr.bf16.mxu0 0
  %415 = vmatpush2.bf16.msra.mxu0 0
  %416 = vmatprep.subr.bf16.mxu0 0
  %417 = vmatpush2.bf16.msra.mxu0 0
  %418 = vmatprep.subr.bf16.mxu0 0
  %419 = vmatpush2.bf16.msra.mxu0 0
  %420 = vmatprep.subr.bf16.mxu0 0
  %421 = vmatpush2.bf16.msra.mxu0 0
  %422 = vmatprep.subr.bf16.mxu0 0
  %423 = vmatpush2.bf16.msra.mxu0 0
  %424 = vmatprep.mubr.bf16.mxu0 0
  %425 = vmatmul.mubr.bf16.gmra.mxu0 %v320
  %v426 = vpop.f32.mrf.mxu0
  %v427 = vadd.f32 %v342, %v426
  %v428 = vpop.f32.mrf.mxu0
  %v429 = vpop.f32.mrf.mxu0
  %v430 = vpop.f32.mrf.mxu0
  %431 = vdwg.mxu0
  %v432 = vpack.c.bf16 %v427, %v427
  %433 = vst [vmem:[%s7] sm:$0xf] %v432
  // Predicated region
  $region30: #{subnet_forward.1} parent=0 // pred_check
    _
  $region31: #{subnet_forward.1} parent=0 // pred_check_branch
    %435 = sbr.rel (0) target = $region33
  $region32: #{subnet_forward.1} parent=0 // pred_region
    _
  $region33: #{subnet_forward.1} parent=0 // pred_fallthru
    _
  // Predicated region
  $region34: #{subnet_forward.1} parent=0 // pred_check
    _
  $region35: #{subnet_forward.1} parent=0 // pred_check_branch
    %437 = sbr.rel (0) target = $region37
  $region36: #{subnet_forward.1} parent=0 // pred_region
    _
  $region37: #{subnet_forward.1} parent=0 // pred_fallthru
    _

</llo_original>
